<compile_context>
chip_gen: v7x
topology: tpu7x:2x2x1
jax: 0.10.0
libtpu: 0.0.40
codegen_flags: <defaults>
</compile_context>

<pallas_src>
import functools
import math

import jax
import jax.numpy as jnp
from jax.experimental import pallas as pl
from jax.experimental.pallas import tpu as pltpu


def _cdiv(a, b):
    return -(-a // b)


def _round_up(a, b):
    return _cdiv(a, b) * b


def _chip_tuning():
    """Returns (tile_budget_bytes, vmem_limit_bytes, assume_two_tensorcores)."""
    vmem_cap = None
    try:
        vmem_cap = int(pltpu.get_tpu_info().vmem_capacity_bytes)
    except Exception:
        vmem_cap = None
    if vmem_cap is not None and vmem_cap >= 100 * 1024 * 1024:
        # v5e / v6e: 128 MiB VMEM per (single) TensorCore -> go wide.
        return 44 * 1024 * 1024, 80 * 1024 * 1024, False
    # v7x (64 MiB per TC, 2 TCs/chip) or unknown: conservative, balance grid.
    return 20 * 1024 * 1024, 32 * 1024 * 1024, True


def _pick_row_tile(rows, feat, itemsize, tile_budget, max_row_tile, two_tc):
    """Largest row tile that fits the VMEM budget; divisor-of-rows preferred."""
    row_align = max(8, 32 // itemsize)          # sublane packing per dtype
    # Per-row VMEM footprint: double-buffered in + out tiles (input dtype)
    # plus ~3 full-tile f32 temporaries live in the kernel body.
    bytes_per_row = feat * (4 * itemsize + 3 * 4)
    tm = tile_budget // max(bytes_per_row, 1)
    tm = max(row_align, min(int(tm), int(max_row_tile)))
    if tm >= rows:
        return rows                              # single full-dim block
    tm = max(row_align, (tm // row_align) * row_align)
    # Prefer a tm that divides rows (no ragged last block) if one is within
    # 2x of the budget-chosen tile.
    for cand in range(tm, max(row_align, tm // 2) - 1, -row_align):
        if rows % cand == 0:
            tm = cand
            break
    # v7x only: keep the number of grid steps even so both TensorCores get
    # equal work under "parallel" sharding. Single-TC parts skip this (it only
    # adds an extra grid step of fixed overhead there).
    n_steps = _cdiv(rows, tm)
    if two_tc and n_steps > 1 and n_steps % 2 == 1:
        tm_alt = _round_up(_cdiv(rows, n_steps + 1), row_align)
        if row_align <= tm_alt < rows and _cdiv(rows, tm_alt) % 2 == 0:
            tm = tm_alt
    return tm


# ----------------------------- LayerNorm -------------------------------------


def _layernorm_kernel(x_ref, a_ref, b_ref, o_ref, *, inv_n, inv_nm1, eps,
                      approx_reciprocal):
    x = x_ref[...].astype(jnp.float32)                         # (tm, F)
    mean = jnp.sum(x, axis=-1, keepdims=True) * jnp.float32(inv_n)
    d = x - mean
    # Unbiased variance (divisor N-1) to match torch.std default; for F == 1
    # inv_nm1 is NaN, exactly like torch.
    var = jnp.sum(d * d, axis=-1, keepdims=True) * jnp.float32(inv_nm1)
    inv = pl.reciprocal(jnp.sqrt(var) + jnp.float32(eps),
                        approx=approx_reciprocal)
    scale = a_ref[...].astype(jnp.float32) * inv               # (tm, F)
    # Recompute (x - mean) rather than carrying `d` live through the store --
    # one fewer full-tile f32 temporary (matters most on v7x's 64 MiB VMEM).
    y = (x - mean) * scale + b_ref[...].astype(jnp.float32)
    o_ref[...] = y.astype(o_ref.dtype)


def layer_norm(x, a_2, b_2, eps=1e-6, *, approx_reciprocal=False,
               max_row_tile=8192):
    """x: (..., F); a_2, b_2: (F,). Returns same shape/dtype as x."""
    orig_shape = x.shape
    feat = int(orig_shape[-1])
    rows = int(math.prod(orig_shape[:-1]))
    x2 = x.reshape(rows, feat)
    a2 = a_2.reshape(1, feat)
    b2 = b_2.reshape(1, feat)

    itemsize = jnp.dtype(x.dtype).itemsize
    tile_budget, vmem_limit, two_tc = _chip_tuning()
    tm = _pick_row_tile(rows, feat, itemsize, tile_budget, max_row_tile, two_tc)
    grid = (_cdiv(rows, tm),)

    inv_nm1 = (1.0 / (feat - 1)) if feat > 1 else float("nan")
    kernel = functools.partial(
        _layernorm_kernel, inv_n=1.0 / feat, inv_nm1=inv_nm1, eps=eps,
        approx_reciprocal=approx_reciprocal)

    cost = pl.CostEstimate(
        flops=8 * rows * feat,
        transcendentals=2 * rows,
        bytes_accessed=2 * rows * feat * itemsize + 2 * feat * 4,
    )

    out = pl.pallas_call(
        kernel,
        out_shape=jax.ShapeDtypeStruct((rows, feat), x.dtype),
        grid_spec=pltpu.PrefetchScalarGridSpec(
            num_scalar_prefetch=0,
            grid=grid,
            in_specs=[
                pl.BlockSpec((tm, feat), lambda i: (i, 0)),
                pl.BlockSpec((1, feat), lambda i: (0, 0)),
                pl.BlockSpec((1, feat), lambda i: (0, 0)),
            ],
            out_specs=pl.BlockSpec((tm, feat), lambda i: (i, 0)),
        ),
        compiler_params=pltpu.CompilerParams(
            dimension_semantics=("parallel",),
            vmem_limit_bytes=vmem_limit,
        ),
        cost_estimate=cost,
    )(x2, a2, b2)

    return out.reshape(orig_shape)


def _layer_norm_reference(x, a_2, b_2, eps=1e-6):
    x32 = x.astype(jnp.float32)
    mean = jnp.mean(x32, axis=-1, keepdims=True)
    std = jnp.sqrt(jnp.var(x32, axis=-1, keepdims=True, ddof=1))  # unbiased
    return (a_2 * (x32 - mean) / (std + eps) + b_2).astype(x.dtype)


# --------------- rgb_I3D64f.avgpool = AvgPool3d((1, 7, 7), stride=1) ---------


def _row_mean_kernel(x_ref, o_ref, *, inv_n):
    x = x_ref[...].astype(jnp.float32)                         # (tm, K)
    o_ref[...] = (jnp.sum(x, axis=-1, keepdims=True)
                  * jnp.float32(inv_n)).astype(o_ref.dtype)


def avg_pool3d_spatial(x, *, max_row_tile=8192):
    """AvgPool3d((1, H, W), stride=1) on an input whose spatial dims equal the
    window, i.e. a global spatial mean per (batch, channel, frame) — the case
    rgb_I3D64f actually exercises. x: (B, C, T, H, W) -> (B, C, T, 1, 1)."""
    b, c, t, h, w = x.shape
    rows = b * c * t
    feat = h * w
    x2 = x.reshape(rows, feat)

    itemsize = jnp.dtype(x.dtype).itemsize
    tile_budget, vmem_limit, two_tc = _chip_tuning()
    tm = _pick_row_tile(rows, feat, itemsize, tile_budget, max_row_tile, two_tc)
    grid = (_cdiv(rows, tm),)

    cost = pl.CostEstimate(
        flops=rows * feat,
        transcendentals=0,
        bytes_accessed=rows * feat * itemsize + rows * itemsize,
    )

    # TODO(synk): output lane width is 1 (masked stores); acceptable for the
    # tiny (rows, 1) result this pooling stage produces.
    out = pl.pallas_call(
        functools.partial(_row_mean_kernel, inv_n=1.0 / feat),
        out_shape=jax.ShapeDtypeStruct((rows, 1), x.dtype),
        grid_spec=pltpu.PrefetchScalarGridSpec(
            num_scalar_prefetch=0,
            grid=grid,
            in_specs=[pl.BlockSpec((tm, feat), lambda i: (i, 0))],
            out_specs=pl.BlockSpec((tm, 1), lambda i: (i, 0)),
        ),
        compiler_params=pltpu.CompilerParams(
            dimension_semantics=("parallel",),
            vmem_limit_bytes=vmem_limit,
        ),
        cost_estimate=cost,
    )(x2)
    return out.reshape(b, c, t, 1, 1)


# ------------------------------------------------------------------------------


if __name__ == "__main__":
    key = jax.random.PRNGKey(0)
    k1, k2 = jax.random.split(key)

    # --- LayerNorm (BERT-head component of i3dBERT) ---
    batch, seq, features = 2, 8, 32
    x = jax.random.normal(k1, (batch, seq, features), dtype=jnp.float32)
    # Deterministic params, matching nn.Parameter(torch.ones/zeros(features)).
    a_2 = jnp.ones((features,), dtype=jnp.float32)
    b_2 = jnp.zeros((features,), dtype=jnp.float32)

    out = jax.block_until_ready(layer_norm(x, a_2, b_2, eps=1e-6))
    ref = _layer_norm_reference(x, a_2, b_2, eps=1e-6)
    assert out.shape == x.shape and out.dtype == x.dtype
    assert jnp.max(jnp.abs(out - ref)) < 1e-5, "layer_norm mismatch vs reference"

    # --- rgb_I3D64f.avgpool = AvgPool3d((1, 7, 7), stride=1) ---
    b, c, t, h, w = 2, 4, 4, 7, 7
    v = jax.random.normal(k2, (b, c, t, h, w), dtype=jnp.float32)
    pooled = jax.block_until_ready(avg_pool3d_spatial(v))
    pref = jnp.mean(v, axis=(-2, -1), keepdims=True)
    assert pooled.shape == (b, c, t, 1, 1) and pooled.dtype == v.dtype
    assert jnp.max(jnp.abs(pooled - pref)) < 1e-5, "avg_pool mismatch vs reference"

    print("KERNEL_OK")
</pallas_src>

<mosaic_0001>
module attributes {stable_mosaic.version = 11 : i64} {
  func.func @_layernorm_kernel(%arg0: i32, %arg1: memref<16x32xf32, #tpu.memory_space<vmem>>, %arg2: memref<1x32xf32, #tpu.memory_space<vmem>>, %arg3: memref<1x32xf32, #tpu.memory_space<vmem>>, %arg4: memref<16x32xf32, #tpu.memory_space<vmem>>) attributes {dimension_semantics = [#tpu.dimension_semantics<parallel>], iteration_bounds = array<i64: 1>, scalar_prefetch = 0 : i64, scratch_operands = 0 : i64, tpu.core_type = #tpu.core_type<tc>, window_params = [{transform_indices = @transform_0, window_bounds = array<i64: 16, 32>}, {pipeline_mode = #tpu.pipeline_mode<synchronous>, transform_indices = @transform_1, window_bounds = array<i64: 1, 32>}, {pipeline_mode = #tpu.pipeline_mode<synchronous>, transform_indices = @transform_2, window_bounds = array<i64: 1, 32>}, {transform_indices = @transform_3, window_bounds = array<i64: 16, 32>}]} {
    %c0 = arith.constant 0 : index
    %c0_0 = arith.constant 0 : index
    %0 = vector.load %arg1[%c0, %c0_0] : memref<16x32xf32, #tpu.memory_space<vmem>>, vector<16x32xf32>
    %cst = arith.constant dense<0.000000e+00> : vector<16xf32>
    %1 = vector.multi_reduction <add>, %0, %cst [1] : vector<16x32xf32> to vector<16xf32>
    %2 = vector.shape_cast %1 : vector<16xf32> to vector<16x1xf32>
    %cst_1 = arith.constant 3.125000e-02 : f32
    %3 = vector.broadcast %cst_1 : f32 to vector<16x1xf32>
    %4 = arith.mulf %2, %3 : vector<16x1xf32>
    %5 = vector.broadcast %4 : vector<16x1xf32> to vector<16x32xf32>
    %6 = arith.subf %0, %5 : vector<16x32xf32>
    %7 = arith.mulf %6, %6 : vector<16x32xf32>
    %cst_2 = arith.constant dense<0.000000e+00> : vector<16xf32>
    %8 = vector.multi_reduction <add>, %7, %cst_2 [1] : vector<16x32xf32> to vector<16xf32>
    %9 = vector.shape_cast %8 : vector<16xf32> to vector<16x1xf32>
    %cst_3 = arith.constant 0.0322580636 : f32
    %10 = vector.broadcast %cst_3 : f32 to vector<16x1xf32>
    %11 = arith.mulf %9, %10 : vector<16x1xf32>
    %12 = math.sqrt %11 : vector<16x1xf32>
    %cst_4 = arith.constant 9.99999997E-7 : f32
    %13 = vector.broadcast %cst_4 : f32 to vector<16x1xf32>
    %14 = arith.addf %12, %13 : vector<16x1xf32>
    %15 = tpu.reciprocal %14 : vector<16x1xf32> -> vector<16x1xf32>
    %c0_5 = arith.constant 0 : index
    %c0_6 = arith.constant 0 : index
    %16 = vector.load %arg2[%c0_5, %c0_6] : memref<1x32xf32, #tpu.memory_space<vmem>>, vector<1x32xf32>
    %17 = vector.broadcast %16 : vector<1x32xf32> to vector<16x32xf32>
    %18 = vector.broadcast %15 : vector<16x1xf32> to vector<16x32xf32>
    %19 = arith.mulf %17, %18 : vector<16x32xf32>
    %20 = vector.broadcast %4 : vector<16x1xf32> to vector<16x32xf32>
    %21 = arith.subf %0, %20 : vector<16x32xf32>
    %22 = arith.mulf %21, %19 : vector<16x32xf32>
    %c0_7 = arith.constant 0 : index
    %c0_8 = arith.constant 0 : index
    %23 = vector.load %arg3[%c0_7, %c0_8] : memref<1x32xf32, #tpu.memory_space<vmem>>, vector<1x32xf32>
    %24 = vector.broadcast %23 : vector<1x32xf32> to vector<16x32xf32>
    %25 = arith.addf %22, %24 : vector<16x32xf32>
    %c0_9 = arith.constant 0 : index
    %c0_10 = arith.constant 0 : index
    %26 = vector.load %arg4[%c0_9, %c0_10] : memref<16x32xf32, #tpu.memory_space<vmem>>, vector<16x32xf32>
    tpu.vector_store %arg4[%c0_9, %c0_10], %25 {strides = array<i32>} : memref<16x32xf32, #tpu.memory_space<vmem>>, vector<16x32xf32>,
    return
  }
  func.func @transform_0(%arg0: i32) -> (i32, i32) {
    %c0_i32 = arith.constant 0 : i32
    %c0_i32_0 = arith.constant 0 : i32
    return %arg0, %c0_i32 : i32, i32
  }
  func.func @transform_1(%arg0: i32) -> (i32, i32) {
    %c0_i32 = arith.constant 0 : i32
    %c0_i32_0 = arith.constant 0 : i32
    %c0_i32_1 = arith.constant 0 : i32
    return %c0_i32, %c0_i32_0 : i32, i32
  }
  func.func @transform_2(%arg0: i32) -> (i32, i32) {
    %c0_i32 = arith.constant 0 : i32
    %c0_i32_0 = arith.constant 0 : i32
    %c0_i32_1 = arith.constant 0 : i32
    return %c0_i32, %c0_i32_0 : i32, i32
  }
  func.func @transform_3(%arg0: i32) -> (i32, i32) {
    %c0_i32 = arith.constant 0 : i32
    %c0_i32_0 = arith.constant 0 : i32
    return %arg0, %c0_i32 : i32, i32
  }
}

</mosaic_0001>

<llo_original>
// kernel: tpu_custom_call.1
$region0: #{tpu_custom_call.1}
  #allocation0 [shape = 'u32[]', space=smem, size = 0x4, offset = 0x4, fixed_abs, tag = 'smem constant byte address 0x4 - core index']
  #allocation1 [shape = 'u32[144,128]{1,0:T(1,128)}', space=vmem, size = 0x12000, scoped, tag = 'internal scratch']
  %s0 = inlined_call_operand.hbm [shape: f32[16,32], index: 0, kind: input, shape index: {}]
  %s1 = inlined_call_operand.vmem [shape: f32[1,32], index: 1, kind: input, shape index: {}]
  %s2 = inlined_call_operand.vmem [shape: f32[1,32], index: 2, kind: input, shape index: {}]
  %s3 = inlined_call_operand.hbm [shape: f32[16,32], index: 3, kind: output, shape index: {}]
  %s4 = sld [smem:[#allocation0]]
  $region26: #{tpu_custom_call.1} parent=0
    _
  %s6 = ssub.s32 1, %s4
  %s7 = scalar_select 0, %s6, %s4
  $region1: #{tpu_custom_call.1} parent=0
    #allocation2 [shape = 'u8[8192]{0}', space=vmem, size = 0x2000, scoped, tag = 'input window, operand 0, single buffered']
    #allocation3 [shape = 's32[1]{0}', space=sflag, size = 0x4, scoped, tag = 'scoped memory for tpu_custom_call.1']
    #allocation4 [shape = 's32[1]{0}', space=sflag, size = 0x4, scoped, tag = 'scoped memory for tpu_custom_call.1']
    #allocation5 [shape = 'u8[8192]{0}', space=vmem, size = 0x2000, scoped, tag = 'output window, operand 0, single buffered']
    %8 = vsyncpa [#allocation3], 0
    %9 = vsyncpa [#allocation4], 0
    // Predicated region
    $region2: #{tpu_custom_call.1} parent=1 // pred_check
      _
    $region3: #{tpu_custom_call.1} parent=1 // pred_check_branch
      %11 = sbr.rel (0) target = $region5
    $region4: #{tpu_custom_call.1} parent=1 // pred_region
      %s13 = ssub.s32 256, 256
      %14 = vsyncadd [#allocation3], %s13
      %s15 = sshll.u32 [#allocation2], 4
      %s16 = int_to_ptr.vmem [resolvable:$true] %s15
      %21 = dma.hbm_to_vmem [thread:$0]  %s0, 256, %s16, [#allocation3], 128, 128, 8
    $region5: #{tpu_custom_call.1} parent=1 // pred_fallthru
      _
    // Predicated region
    $region6: #{tpu_custom_call.1} parent=1 // pred_check
      _
    $region7: #{tpu_custom_call.1} parent=1 // pred_check_branch
      %23 = sbr.rel (0) target = $region9
    $region8: #{tpu_custom_call.1} parent=1 // pred_region
      _
    $region9: #{tpu_custom_call.1} parent=1 // pred_fallthru
      _
    // Predicated region
    $region10: #{tpu_custom_call.1} parent=1 // pred_check
      _
    $region11: #{tpu_custom_call.1} parent=1 // pred_check_branch
      %25 = sbr.rel (0) target = $region13
    $region12: #{tpu_custom_call.1} parent=1 // pred_region
      _
    $region13: #{tpu_custom_call.1} parent=1 // pred_fallthru
      _
    // Predicated region
    $region14: #{tpu_custom_call.1} parent=1 // pred_check
      _
    $region15: #{tpu_custom_call.1} parent=1 // pred_check_branch
      %27 = sbr.rel (0) target = $region17
    $region16: #{tpu_custom_call.1} parent=1 // pred_region
      %28 = dma.done [#allocation3], 256
    $region17: #{tpu_custom_call.1} parent=1 // pred_fallthru
      _
    %v29 = vld [vmem:[#allocation2] sm:$0xff]
    %v30 = vld [vmem:[#allocation2 + $0x8] sm:$0xff]
    %vm31 = vcmask 261120
    %v32 = vsel %vm31, %v29, 0.0
    %33 = vadd.xlane.f32.xlu0 %v32
    %v34 = vpop.xlane.xlu0 %33
    %v35 = vsel %vm31, %v30, 0.0
    %36 = vadd.xlane.f32.xlu0 %v35
    %v37 = vpop.xlane.xlu0 %36
    %v38 = vmul.f32 %v34, 0.03125
    %v39 = vmul.f32 %v37, 0.03125
    %v40 = vsub.f32 %v29, %v38
    %v41 = vsub.f32 %v30, %v39
    %v42 = vmul.f32 %v40, %v40
    %v43 = vmul.f32 %v41, %v41
    %v44 = vsel %vm31, %v42, 0.0
    %45 = vadd.xlane.f32.xlu0 %v44
    %v46 = vpop.xlane.xlu0 %45
    %v47 = vsel %vm31, %v43, 0.0
    %48 = vadd.xlane.f32.xlu0 %v47
    %v49 = vpop.xlane.xlu0 %48
    %v50 = vmul.f32 %v46, 0.032258064
    %v51 = vmul.f32 %v49, 0.032258064
    %v52 = vrsqrt.pop %v50
    %v53 = vmul.f32 %v50, %v52
    %vm54 = vcmp.eq.f32.partialorder %v50, inf
    %v55 = vsel %vm54, %v50, %v53
    %vm56 = vcmp.eq.f32.partialorder %v50, 0.0
    %v57 = vand.u32 %v50, 2147483648
    %v58 = vsel %vm56, %v57, %v55
    %v59 = vrsqrt.pop %v51
    %v60 = vmul.f32 %v51, %v59
    %vm61 = vcmp.eq.f32.partialorder %v51, inf
    %v62 = vsel %vm61, %v51, %v60
    %vm63 = vcmp.eq.f32.partialorder %v51, 0.0
    %v64 = vand.u32 %v51, 2147483648
    %v65 = vsel %vm63, %v64, %v62
    %v66 = vadd.f32 %v58, 1e-06
    %v67 = vadd.f32 %v65, 1e-06
    %v68 = vrcp.pop %v66
    %v69 = vrcp.pop %v67
    %v70 = vld [vmem:[%s1] sm:$0x1]
    %v72 = vlaneseq
    %v73 = vshrl.u32 %v72, 7
    %v74 = vsub.s32 0, %v73
    %v75 = vrot.slane %v70, %v74
    %v77 = vmul.f32 %v75, %v68
    %v78 = vmul.f32 %v75, %v69
    %v79 = vmul.f32 %v40, %v77
    %v80 = vmul.f32 %v41, %v78
    %v81 = vld [vmem:[%s2] sm:$0x1]
    %v83 = vlaneseq
    %v84 = vshrl.u32 %v83, 7
    %v85 = vsub.s32 0, %v84
    %v86 = vrot.slane %v81, %v85
    %v88 = vadd.f32 %v79, %v86
    %v89 = vadd.f32 %v80, %v86
    %90 = vst.msk [vmem:[#allocation5] sm:$0xff] %vm31, %v88
    %91 = vst.msk [vmem:[#allocation5 + $0x8] sm:$0xff] %vm31, %v89
    // Predicated region
    $region18: #{tpu_custom_call.1} parent=1 // pred_check
      _
    $region19: #{tpu_custom_call.1} parent=1 // pred_check_branch
      %93 = sbr.rel (0) target = $region21
    $region20: #{tpu_custom_call.1} parent=1 // pred_region
      %s95 = ssub.s32 256, 256
      %96 = vsyncadd [#allocation4], %s95
      %s97 = sshll.u32 [#allocation5], 4
      %s98 = int_to_ptr.vmem [resolvable:$true] %s97
      %103 = dma.vmem_to_hbm [thread:$0]  %s98, 256, %s3, [#allocation4], 128, 128, 8
    $region21: #{tpu_custom_call.1} parent=1 // pred_fallthru
      _
    // Predicated region
    $region22: #{tpu_custom_call.1} parent=1 // pred_check
      _
    $region23: #{tpu_custom_call.1} parent=1 // pred_check_branch
      %105 = sbr.rel (0) target = $region25
    $region24: #{tpu_custom_call.1} parent=1 // pred_region
      %106 = dma.done [#allocation4], 256
    $region25: #{tpu_custom_call.1} parent=1 // pred_fallthru
      _
    %107 = vsyncpa [#allocation3], 1
    %108 = vsyncpa [#allocation4], 1

</llo_original>
